<compile_context>
chip_gen: v7x
topology: tpu7x:2x2x1
jax: 0.10.0
libtpu: 0.0.40
codegen_flags: <defaults>
</compile_context>

<pallas_src>
import functools

import jax
import jax.numpy as jnp
from jax.experimental import pallas as pl
from jax.experimental.pallas import tpu as pltpu

# ---- synthetic hyper-parameters (stand-in for Parameters()) -----------------
ACTOR_NUM_HIDDEN = 3      # number of ReLU layers (input_layer + num_hidden-1 hidden)
ACTOR_SIZE_HIDDEN = 32
EXP_CONSTANT = -1.0
OUT_DIM = 4


def _round_up(x, m):
    return ((x + m - 1) // m) * m


def _pad_feature_dim(d):
    """Lane-friendly padded feature dim (19 -> 32; large dims -> multiple of 128)."""
    if d <= 32:
        return 32
    return _round_up(d, 128)


# -----------------------------------------------------------------------------
# Kernel
# -----------------------------------------------------------------------------
def actor_kernel(*refs, num_relu_layers, exp_constant, training):
    """All layers fused; runs once per (TM,) batch tile.

    refs = (x_ref,
            w0_ref, b0_ref, ..., w{L-1}_ref, b{L-1}_ref,   # ReLU layers
            wo_ref, bo_ref,                                # output layer
            o_ref)
    """
    x_ref = refs[0]
    o_ref = refs[-1]
    param_refs = refs[1:-1]

    y = x_ref[...]  # bf16 tile, feature dim already zero-padded

    # ReLU hidden stack (input_layer + hidden_layers): bf16 operands, f32 acc.
    for layer in range(num_relu_layers):
        w = param_refs[2 * layer][...]            # bf16 (in, out)
        b = param_refs[2 * layer + 1][...]        # f32  (1, out)
        z = jnp.dot(y, w, preferred_element_type=jnp.float32) + b
        y = jnp.maximum(z, 0.0).astype(jnp.bfloat16)

    # output layer (no activation inside feed_forward)
    wo = param_refs[2 * num_relu_layers][...]
    bo = param_refs[2 * num_relu_layers + 1][...]
    out = jnp.dot(y, wo, preferred_element_type=jnp.float32) + bo

    # Actor.forward: 1 / (1 + exp(exp_constant * output)); round() in eval mode.
    # exp -> EUP, reciprocal(approx) -> EUP: keeps the epilogue off the VPU.
    e = jnp.exp(exp_constant * out)
    act = pl.reciprocal(1.0 + e, approx=True)
    if not training:
        act = jnp.round(act)

    o_ref[...] = act


# -----------------------------------------------------------------------------
# Parameters
# -----------------------------------------------------------------------------
def init_actor_params(key, num_players):
    """Deterministic f32 parameter init (shapes match the PyTorch module).

    Weights are stored pre-transposed as (in_features, out_features) so the
    kernel computes y = x @ W + b (== PyTorch's x @ W.T + b).
    """
    in_dim = num_players * 8 + 3
    dims = [in_dim] + [ACTOR_SIZE_HIDDEN] * ACTOR_NUM_HIDDEN + [OUT_DIM]
    params = []
    for i in range(len(dims) - 1):
        key, kw, kb = jax.random.split(key, 3)
        bound = 1.0 / jnp.sqrt(dims[i])
        w = jax.random.uniform(kw, (dims[i], dims[i + 1]), jnp.float32, -bound, bound)
        b = jax.random.uniform(kb, (1, dims[i + 1]), jnp.float32, -bound, bound)
        params.extend([w, b])
    return params


def prepare_params(params_f32, k_pad):
    """HBM-side layout: bf16 weights (first weight zero-padded on its input dim),
    f32 biases. Zero padding keeps the matmul result identical."""
    prepared = []
    for idx in range(0, len(params_f32), 2):
        w, b = params_f32[idx], params_f32[idx + 1]
        if idx == 0 and w.shape[0] < k_pad:
            w = jnp.pad(w, ((0, k_pad - w.shape[0]), (0, 0)))
        prepared.append(w.astype(jnp.bfloat16))
        prepared.append(b.astype(jnp.float32))
    return prepared


# -----------------------------------------------------------------------------
# Wrapper
# -----------------------------------------------------------------------------
def actor_forward(x, params, *, training=True, tile_m=1024):
    """Pallas wrapper: 1-D grid over the batch, weights resident across steps."""
    batch, in_dim = x.shape
    k_pad = params[0].shape[0]           # padded input feature dim
    hidden = ACTOR_SIZE_HIDDEN
    num_relu_layers = ACTOR_NUM_HIDDEN   # input_layer + (num_hidden - 1) hidden layers

    # --- HBM-side layout: bf16 x, zero-padded feature dim, padded batch -------
    x = x.astype(jnp.bfloat16)
    if in_dim < k_pad:
        x = jnp.pad(x, ((0, 0), (0, k_pad - in_dim)))

    tm = min(tile_m, _round_up(batch, 8))      # multiple of 8 (sublane tiling)
    padded_batch = _round_up(batch, tm)
    if padded_batch != batch:
        x = jnp.pad(x, ((0, padded_batch - batch), (0, 0)))
    grid = (padded_batch // tm,)

    # --- BlockSpecs: tiled x/out, constant-index (resident) weights -----------
    in_specs = [pl.BlockSpec((tm, k_pad), lambda i: (i, 0))]
    for p in params:
        in_specs.append(pl.BlockSpec(p.shape, lambda i: (0, 0)))
    out_specs = pl.BlockSpec((tm, OUT_DIM), lambda i: (i, 0))

    # --- advisory cost estimate ------------------------------------------------
    flops = 2 * padded_batch * (
        k_pad * hidden + (num_relu_layers - 1) * hidden * hidden + hidden * OUT_DIM
    )
    bytes_accessed = (
        x.size * x.dtype.itemsize
        + sum(int(p.size) * p.dtype.itemsize for p in params)
        + padded_batch * OUT_DIM * 4
    )
    cost = pl.CostEstimate(
        flops=flops,
        transcendentals=2 * padded_batch * OUT_DIM,   # exp + approx reciprocal
        bytes_accessed=bytes_accessed,
    )

    kernel = functools.partial(
        actor_kernel,
        num_relu_layers=num_relu_layers,
        exp_constant=EXP_CONSTANT,
        training=training,
    )

    out = pl.pallas_call(
        kernel,
        out_shape=jax.ShapeDtypeStruct((padded_batch, OUT_DIM), jnp.float32),
        grid=grid,
        in_specs=in_specs,
        out_specs=out_specs,
        compiler_params=pltpu.CompilerParams(
            dimension_semantics=("parallel",),      # megacore sharding on v7x
            vmem_limit_bytes=32 * 1024 * 1024,
        ),
        cost_estimate=cost,
    )(x, *params)

    return out[:batch]   # drop padded rows in the wrapper (never trust padding)


# -----------------------------------------------------------------------------
# Demo / correctness check
# -----------------------------------------------------------------------------
if __name__ == "__main__":
    key = jax.random.PRNGKey(0)
    num_players = 2
    in_dim = num_players * 8 + 3          # 19
    batch = 8

    kx, kp = jax.random.split(key)
    x = jax.random.normal(kx, (batch, in_dim), jnp.float32)
    raw_params = init_actor_params(kp, num_players)

    k_pad = _pad_feature_dim(in_dim)
    params = prepare_params(raw_params, k_pad)

    # training-mode forward (module default): sigmoid-like output, no rounding
    out_train = actor_forward(x, params, training=True)
    # eval-mode forward: rounded
    out_eval = actor_forward(x, params, training=False)
    jax.block_until_ready(out_train)
    jax.block_until_ready(out_eval)

    # pure-JAX reference on the SAME bf16/padded data (module semantics at bf16)
    def ref_forward(xp, params):
        y = xp
        for layer in range(ACTOR_NUM_HIDDEN):
            z = jnp.dot(y, params[2 * layer],
                        preferred_element_type=jnp.float32) + params[2 * layer + 1]
            y = jnp.maximum(z, 0.0).astype(jnp.bfloat16)
        out = jnp.dot(y, params[-2], preferred_element_type=jnp.float32) + params[-1]
        return 1.0 / (1.0 + jnp.exp(EXP_CONSTANT * out))

    xp = jnp.pad(x.astype(jnp.bfloat16), ((0, 0), (0, k_pad - in_dim)))
    ref_train = ref_forward(xp, params)

    assert out_train.shape == (batch, OUT_DIM)
    assert out_eval.shape == (batch, OUT_DIM)
    assert jnp.allclose(out_train, ref_train, atol=5e-3), "train-mode mismatch"
    assert jnp.allclose(out_eval, jnp.round(out_train)), "eval-mode rounding mismatch"

    print("KERNEL_OK")
</pallas_src>

<mosaic_0001>
module attributes {stable_mosaic.version = 11 : i64} {
  func.func @actor_kernel(%arg0: i32, %arg1: memref<8x32xbf16, #tpu.memory_space<vmem>>, %arg2: memref<32x32xbf16, #tpu.memory_space<vmem>>, %arg3: memref<1x32xf32, #tpu.memory_space<vmem>>, %arg4: memref<32x32xbf16, #tpu.memory_space<vmem>>, %arg5: memref<1x32xf32, #tpu.memory_space<vmem>>, %arg6: memref<32x32xbf16, #tpu.memory_space<vmem>>, %arg7: memref<1x32xf32, #tpu.memory_space<vmem>>, %arg8: memref<32x4xbf16, #tpu.memory_space<vmem>>, %arg9: memref<1x4xf32, #tpu.memory_space<vmem>>, %arg10: memref<8x4xf32, #tpu.memory_space<vmem>>) attributes {dimension_semantics = [#tpu.dimension_semantics<parallel>], iteration_bounds = array<i64: 1>, scalar_prefetch = 0 : i64, scratch_operands = 0 : i64, tpu.core_type = #tpu.core_type<tc>, window_params = [{transform_indices = @transform_0, window_bounds = array<i64: 8, 32>}, {pipeline_mode = #tpu.pipeline_mode<synchronous>, transform_indices = @transform_1, window_bounds = array<i64: 32, 32>}, {pipeline_mode = #tpu.pipeline_mode<synchronous>, transform_indices = @transform_2, window_bounds = array<i64: 1, 32>}, {pipeline_mode = #tpu.pipeline_mode<synchronous>, transform_indices = @transform_3, window_bounds = array<i64: 32, 32>}, {pipeline_mode = #tpu.pipeline_mode<synchronous>, transform_indices = @transform_4, window_bounds = array<i64: 1, 32>}, {pipeline_mode = #tpu.pipeline_mode<synchronous>, transform_indices = @transform_5, window_bounds = array<i64: 32, 32>}, {pipeline_mode = #tpu.pipeline_mode<synchronous>, transform_indices = @transform_6, window_bounds = array<i64: 1, 32>}, {pipeline_mode = #tpu.pipeline_mode<synchronous>, transform_indices = @transform_7, window_bounds = array<i64: 32, 4>}, {pipeline_mode = #tpu.pipeline_mode<synchronous>, transform_indices = @transform_8, window_bounds = array<i64: 1, 4>}, {transform_indices = @transform_9, window_bounds = array<i64: 8, 4>}]} {
    %c0 = arith.constant 0 : index
    %c0_0 = arith.constant 0 : index
    %0 = vector.load %arg1[%c0, %c0_0] : memref<8x32xbf16, #tpu.memory_space<vmem>>, vector<8x32xbf16>
    %c0_1 = arith.constant 0 : index
    %c0_2 = arith.constant 0 : index
    %1 = vector.load %arg2[%c0_1, %c0_2] : memref<32x32xbf16, #tpu.memory_space<vmem>>, vector<32x32xbf16>
    %c0_3 = arith.constant 0 : index
    %c0_4 = arith.constant 0 : index
    %2 = vector.load %arg3[%c0_3, %c0_4] : memref<1x32xf32, #tpu.memory_space<vmem>>, vector<1x32xf32>
    %cst = arith.constant dense<0.000000e+00> : vector<8x32xf32>
    %3 = tpu.matmul %0, %1, %cst {dimension_numbers = #tpu.dot_dimension_numbers<[1], [0], [0], [1], [0, 0, 1, 1], [], []>} : vector<8x32xbf16>, vector<32x32xbf16>, vector<8x32xf32> -> vector<8x32xf32>
    %4 = vector.broadcast %2 : vector<1x32xf32> to vector<8x32xf32>
    %5 = arith.addf %3, %4 : vector<8x32xf32>
    %cst_5 = arith.constant 0.000000e+00 : f32
    %6 = vector.broadcast %cst_5 : f32 to vector<8x32xf32>
    %7 = arith.maximumf %5, %6 : vector<8x32xf32>
    %8 = arith.truncf %7 : vector<8x32xf32> to vector<8x32xbf16>
    %c0_6 = arith.constant 0 : index
    %c0_7 = arith.constant 0 : index
    %9 = vector.load %arg4[%c0_6, %c0_7] : memref<32x32xbf16, #tpu.memory_space<vmem>>, vector<32x32xbf16>
    %c0_8 = arith.constant 0 : index
    %c0_9 = arith.constant 0 : index
    %10 = vector.load %arg5[%c0_8, %c0_9] : memref<1x32xf32, #tpu.memory_space<vmem>>, vector<1x32xf32>
    %cst_10 = arith.constant dense<0.000000e+00> : vector<8x32xf32>
    %11 = tpu.matmul %8, %9, %cst_10 {dimension_numbers = #tpu.dot_dimension_numbers<[1], [0], [0], [1], [0, 0, 1, 1], [], []>} : vector<8x32xbf16>, vector<32x32xbf16>, vector<8x32xf32> -> vector<8x32xf32>
    %12 = vector.broadcast %10 : vector<1x32xf32> to vector<8x32xf32>
    %13 = arith.addf %11, %12 : vector<8x32xf32>
    %cst_11 = arith.constant 0.000000e+00 : f32
    %14 = vector.broadcast %cst_11 : f32 to vector<8x32xf32>
    %15 = arith.maximumf %13, %14 : vector<8x32xf32>
    %16 = arith.truncf %15 : vector<8x32xf32> to vector<8x32xbf16>
    %c0_12 = arith.constant 0 : index
    %c0_13 = arith.constant 0 : index
    %17 = vector.load %arg6[%c0_12, %c0_13] : memref<32x32xbf16, #tpu.memory_space<vmem>>, vector<32x32xbf16>
    %c0_14 = arith.constant 0 : index
    %c0_15 = arith.constant 0 : index
    %18 = vector.load %arg7[%c0_14, %c0_15] : memref<1x32xf32, #tpu.memory_space<vmem>>, vector<1x32xf32>
    %cst_16 = arith.constant dense<0.000000e+00> : vector<8x32xf32>
    %19 = tpu.matmul %16, %17, %cst_16 {dimension_numbers = #tpu.dot_dimension_numbers<[1], [0], [0], [1], [0, 0, 1, 1], [], []>} : vector<8x32xbf16>, vector<32x32xbf16>, vector<8x32xf32> -> vector<8x32xf32>
    %20 = vector.broadcast %18 : vector<1x32xf32> to vector<8x32xf32>
    %21 = arith.addf %19, %20 : vector<8x32xf32>
    %cst_17 = arith.constant 0.000000e+00 : f32
    %22 = vector.broadcast %cst_17 : f32 to vector<8x32xf32>
    %23 = arith.maximumf %21, %22 : vector<8x32xf32>
    %24 = arith.truncf %23 : vector<8x32xf32> to vector<8x32xbf16>
    %c0_18 = arith.constant 0 : index
    %c0_19 = arith.constant 0 : index
    %25 = vector.load %arg8[%c0_18, %c0_19] : memref<32x4xbf16, #tpu.memory_space<vmem>>, vector<32x4xbf16>
    %c0_20 = arith.constant 0 : index
    %c0_21 = arith.constant 0 : index
    %26 = vector.load %arg9[%c0_20, %c0_21] : memref<1x4xf32, #tpu.memory_space<vmem>>, vector<1x4xf32>
    %cst_22 = arith.constant dense<0.000000e+00> : vector<8x4xf32>
    %27 = tpu.matmul %24, %25, %cst_22 {dimension_numbers = #tpu.dot_dimension_numbers<[1], [0], [0], [1], [0, 0, 1, 1], [], []>} : vector<8x32xbf16>, vector<32x4xbf16>, vector<8x4xf32> -> vector<8x4xf32>
    %28 = vector.broadcast %26 : vector<1x4xf32> to vector<8x4xf32>
    %29 = arith.addf %27, %28 : vector<8x4xf32>
    %cst_23 = arith.constant -1.000000e+00 : f32
    %30 = vector.broadcast %cst_23 : f32 to vector<8x4xf32>
    %31 = arith.mulf %30, %29 : vector<8x4xf32>
    %32 = math.exp %31 : vector<8x4xf32>
    %cst_24 = arith.constant 1.000000e+00 : f32
    %33 = vector.broadcast %cst_24 : f32 to vector<8x4xf32>
    %34 = arith.addf %33, %32 : vector<8x4xf32>
    %35 = tpu.reciprocal %34 {approx = true} : vector<8x4xf32> -> vector<8x4xf32>
    %c0_25 = arith.constant 0 : index
    %c0_26 = arith.constant 0 : index
    %36 = vector.load %arg10[%c0_25, %c0_26] : memref<8x4xf32, #tpu.memory_space<vmem>>, vector<8x4xf32>
    tpu.vector_store %arg10[%c0_25, %c0_26], %35 {strides = array<i32>} : memref<8x4xf32, #tpu.memory_space<vmem>>, vector<8x4xf32>,
    return
  }
  func.func @transform_0(%arg0: i32) -> (i32, i32) {
    %c0_i32 = arith.constant 0 : i32
    %c0_i32_0 = arith.constant 0 : i32
    return %arg0, %c0_i32 : i32, i32
  }
  func.func @transform_1(%arg0: i32) -> (i32, i32) {
    %c0_i32 = arith.constant 0 : i32
    %c0_i32_0 = arith.constant 0 : i32
    %c0_i32_1 = arith.constant 0 : i32
    return %c0_i32, %c0_i32_0 : i32, i32
  }
  func.func @transform_2(%arg0: i32) -> (i32, i32) {
    %c0_i32 = arith.constant 0 : i32
    %c0_i32_0 = arith.constant 0 : i32
    %c0_i32_1 = arith.constant 0 : i32
    return %c0_i32, %c0_i32_0 : i32, i32
  }
  func.func @transform_3(%arg0: i32) -> (i32, i32) {
    %c0_i32 = arith.constant 0 : i32
    %c0_i32_0 = arith.constant 0 : i32
    %c0_i32_1 = arith.constant 0 : i32
    return %c0_i32, %c0_i32_0 : i32, i32
  }
  func.func @transform_4(%arg0: i32) -> (i32, i32) {
    %c0_i32 = arith.constant 0 : i32
    %c0_i32_0 = arith.constant 0 : i32
    %c0_i32_1 = arith.constant 0 : i32
    return %c0_i32, %c0_i32_0 : i32, i32
  }
  func.func @transform_5(%arg0: i32) -> (i32, i32) {
    %c0_i32 = arith.constant 0 : i32
    %c0_i32_0 = arith.constant 0 : i32
    %c0_i32_1 = arith.constant 0 : i32
    return %c0_i32, %c0_i32_0 : i32, i32
  }
  func.func @transform_6(%arg0: i32) -> (i32, i32) {
    %c0_i32 = arith.constant 0 : i32
    %c0_i32_0 = arith.constant 0 : i32
    %c0_i32_1 = arith.constant 0 : i32
    return %c0_i32, %c0_i32_0 : i32, i32
  }
  func.func @transform_7(%arg0: i32) -> (i32, i32) {
    %c0_i32 = arith.constant 0 : i32
    %c0_i32_0 = arith.constant 0 : i32
    %c0_i32_1 = arith.constant 0 : i32
    return %c0_i32, %c0_i32_0 : i32, i32
  }
  func.func @transform_8(%arg0: i32) -> (i32, i32) {
    %c0_i32 = arith.constant 0 : i32
    %c0_i32_0 = arith.constant 0 : i32
    %c0_i32_1 = arith.constant 0 : i32
    return %c0_i32, %c0_i32_0 : i32, i32
  }
  func.func @transform_9(%arg0: i32) -> (i32, i32) {
    %c0_i32 = arith.constant 0 : i32
    %c0_i32_0 = arith.constant 0 : i32
    return %arg0, %c0_i32 : i32, i32
  }
}

</mosaic_0001>

<llo_original>
// kernel: tpu_custom_call.1
$region0: #{tpu_custom_call.1}
  #allocation0 [shape = 'u32[]', space=smem, size = 0x4, offset = 0x4, fixed_abs, tag = 'smem constant byte address 0x4 - core index']
  #allocation1 [shape = 'u32[144,128]{1,0:T(1,128)}', space=vmem, size = 0x12000, scoped, tag = 'internal scratch']
  %s0 = inlined_call_operand.hbm [shape: bf16[8,32], index: 0, kind: input, shape index: {}]
  %s1 = inlined_call_operand.vmem [shape: bf16[32,32], index: 1, kind: input, shape index: {}]
  %s2 = inlined_call_operand.vmem [shape: f32[1,32], index: 2, kind: input, shape index: {}]
  %s3 = inlined_call_operand.hbm [shape: bf16[32,32], index: 3, kind: input, shape index: {}]
  %s4 = inlined_call_operand.hbm [shape: f32[1,32], index: 4, kind: input, shape index: {}]
  %s5 = inlined_call_operand.vmem [shape: bf16[32,32], index: 5, kind: input, shape index: {}]
  %s6 = inlined_call_operand.vmem [shape: f32[1,32], index: 6, kind: input, shape index: {}]
  %s7 = inlined_call_operand.vmem [shape: bf16[32,4], index: 7, kind: input, shape index: {}]
  %s8 = inlined_call_operand.vmem [shape: f32[1,4], index: 8, kind: input, shape index: {}]
  %s9 = inlined_call_operand.vmem [shape: f32[8,4], index: 9, kind: output, shape index: {}]
  %s10 = sld [smem:[#allocation0]]
  $region58: #{tpu_custom_call.1} parent=0
    _
  %s12 = ssub.s32 1, %s10
  %s13 = scalar_select 0, %s12, %s10
  $region1: #{tpu_custom_call.1} parent=0
    #allocation2 [shape = 'u8[2048]{0}', space=vmem, size = 0x800, scoped, tag = 'input window, operand 0, single buffered']
    #allocation3 [shape = 's32[1]{0}', space=sflag, size = 0x4, scoped, tag = 'scoped memory for tpu_custom_call.1']
    #allocation4 [shape = 'u8[8192]{0}', space=vmem, size = 0x2000, scoped, tag = 'input window, operand 3, single buffered']
    #allocation5 [shape = 's32[1]{0}', space=sflag, size = 0x4, scoped, tag = 'scoped memory for tpu_custom_call.1']
    #allocation6 [shape = 'u8[512]{0}', space=vmem, size = 0x400, scoped, tag = 'input window, operand 4, single buffered']
    %14 = vsyncpa [#allocation3], 0
    %15 = vsyncpa [#allocation5], 0
    // Predicated region
    $region2: #{tpu_custom_call.1} parent=1 // pred_check
      _
    $region3: #{tpu_custom_call.1} parent=1 // pred_check_branch
      %17 = sbr.rel (0) target = $region5
    $region4: #{tpu_custom_call.1} parent=1 // pred_region
      %s19 = ssub.s32 64, 64
      %20 = vsyncadd [#allocation3], %s19
      %s22 = sshll.u32 [#allocation2], 4
      %s23 = int_to_ptr.vmem [resolvable:$true] %s22
      %25 = dma.hbm_to_vmem [thread:$0]  %s0, 64, %s23, [#allocation3]
    $region5: #{tpu_custom_call.1} parent=1 // pred_fallthru
      _
    // Predicated region
    $region6: #{tpu_custom_call.1} parent=1 // pred_check
      _
    $region7: #{tpu_custom_call.1} parent=1 // pred_check_branch
      %27 = sbr.rel (0) target = $region9
    $region8: #{tpu_custom_call.1} parent=1 // pred_region
      _
    $region9: #{tpu_custom_call.1} parent=1 // pred_fallthru
      _
    // Predicated region
    $region10: #{tpu_custom_call.1} parent=1 // pred_check
      _
    $region11: #{tpu_custom_call.1} parent=1 // pred_check_branch
      %29 = sbr.rel (0) target = $region13
    $region12: #{tpu_custom_call.1} parent=1 // pred_region
      _
    $region13: #{tpu_custom_call.1} parent=1 // pred_fallthru
      _
    // Predicated region
    $region14: #{tpu_custom_call.1} parent=1 // pred_check
      _
    $region15: #{tpu_custom_call.1} parent=1 // pred_check_branch
      %31 = sbr.rel (0) target = $region17
    $region16: #{tpu_custom_call.1} parent=1 // pred_region
      %s33 = ssub.s32 256, 256
      %34 = vsyncadd [#allocation5], %s33
      %s35 = sshll.u32 [#allocation4], 4
      %s36 = int_to_ptr.vmem [resolvable:$true] %s35
      %41 = dma.hbm_to_vmem [thread:$0]  %s3, 256, %s36, [#allocation5], 64, 64, 4
    $region17: #{tpu_custom_call.1} parent=1 // pred_fallthru
      _
    // Predicated region
    $region18: #{tpu_custom_call.1} parent=1 // pred_check
      _
    $region19: #{tpu_custom_call.1} parent=1 // pred_check_branch
      %43 = sbr.rel (0) target = $region21
    $region20: #{tpu_custom_call.1} parent=1 // pred_region
      %s45 = ssub.s32 16, 16
      %46 = vsyncadd [#allocation5], %s45
      %s48 = sshll.u32 [#allocation6], 4
      %s49 = int_to_ptr.vmem [resolvable:$true] %s48
      %51 = dma.hbm_to_vmem [thread:$0]  %s4, 16, %s49, [#allocation5]
    $region21: #{tpu_custom_call.1} parent=1 // pred_fallthru
      _
    // Predicated region
    $region22: #{tpu_custom_call.1} parent=1 // pred_check
      _
    $region23: #{tpu_custom_call.1} parent=1 // pred_check_branch
      %53 = sbr.rel (0) target = $region25
    $region24: #{tpu_custom_call.1} parent=1 // pred_region
      _
    $region25: #{tpu_custom_call.1} parent=1 // pred_fallthru
      _
    // Predicated region
    $region26: #{tpu_custom_call.1} parent=1 // pred_check
      _
    $region27: #{tpu_custom_call.1} parent=1 // pred_check_branch
      %55 = sbr.rel (0) target = $region29
    $region28: #{tpu_custom_call.1} parent=1 // pred_region
      _
    $region29: #{tpu_custom_call.1} parent=1 // pred_fallthru
      _
    // Predicated region
    $region30: #{tpu_custom_call.1} parent=1 // pred_check
      _
    $region31: #{tpu_custom_call.1} parent=1 // pred_check_branch
      %57 = sbr.rel (0) target = $region33
    $region32: #{tpu_custom_call.1} parent=1 // pred_region
      _
    $region33: #{tpu_custom_call.1} parent=1 // pred_fallthru
      _
    // Predicated region
    $region34: #{tpu_custom_call.1} parent=1 // pred_check
      _
    $region35: #{tpu_custom_call.1} parent=1 // pred_check_branch
      %59 = sbr.rel (0) target = $region37
    $region36: #{tpu_custom_call.1} parent=1 // pred_region
      _
    $region37: #{tpu_custom_call.1} parent=1 // pred_fallthru
      _
    // Predicated region
    $region38: #{tpu_custom_call.1} parent=1 // pred_check
      _
    $region39: #{tpu_custom_call.1} parent=1 // pred_check_branch
      %61 = sbr.rel (0) target = $region41
    $region40: #{tpu_custom_call.1} parent=1 // pred_region
      %62 = dma.done [#allocation3], 64
    $region41: #{tpu_custom_call.1} parent=1 // pred_fallthru
      _
    // Predicated region
    $region42: #{tpu_custom_call.1} parent=1 // pred_check
      _
    $region43: #{tpu_custom_call.1} parent=1 // pred_check_branch
      %64 = sbr.rel (0) target = $region45
    $region44: #{tpu_custom_call.1} parent=1 // pred_region
      %65 = dma.done [#allocation5], 256
    $region45: #{tpu_custom_call.1} parent=1 // pred_fallthru
      _
    // Predicated region
    $region46: #{tpu_custom_call.1} parent=1 // pred_check
      _
    $region47: #{tpu_custom_call.1} parent=1 // pred_check_branch
      %67 = sbr.rel (0) target = $region49
    $region48: #{tpu_custom_call.1} parent=1 // pred_region
      %68 = dma.done [#allocation5], 16
    $region49: #{tpu_custom_call.1} parent=1 // pred_fallthru
      _
    %v70 = vld [vmem:[#allocation2] sm:$0xf]
    %v71 = vld [vmem:[%s1] sm:$0xf]
    %v72 = vld [vmem:[%s1 + $0x4] sm:$0xf]
    %v73 = vld [vmem:[%s1 + $0x8] sm:$0xf]
    %v74 = vld [vmem:[%s1 + $0xc] sm:$0xf]
    %v75 = vld [vmem:[%s2] sm:$0x1]
    %v77 = vlaneseq
    %v78 = vshrl.u32 %v77, 7
    %v79 = vsub.s32 0, %v78
    %v80 = vrot.slane %v75, %v79
    %v86 = vunpack.c.l.b16 %v71
    %v87 = vunpack.c.l.b16 %v72
    %v88 = vunpack.c.l.b16 %v73
    %v89 = vunpack.c.l.b16 %v74
    %v90 = vpack.c.b16 %v87, %v86
    %v91 = vpack.c.b16 %v89, %v88
    %vm94 = vcmask 261120
    %v96 = vsel %vm94, %v70, 0
    %98 = vmatprep.subr.bf16.mxu0 0
    %99 = vmatpush1.bf16.msra.mxu0 %v90
    %100 = vmatprep.subr.bf16.mxu0 0
    %101 = vmatpush1.bf16.msra.mxu0 %v91
    %102 = vmatprep.subr.bf16.mxu0 0
    %103 = vmatpush1.bf16.msra.mxu0 0
    %104 = vmatprep.subr.bf16.mxu0 0
    %105 = vmatpush1.bf16.msra.mxu0 0
    %106 = vmatprep.subr.bf16.mxu0 0
    %107 = vmatpush1.bf16.msra.mxu0 0
    %108 = vmatprep.subr.bf16.mxu0 0
    %109 = vmatpush1.bf16.msra.mxu0 0
    %110 = vmatprep.subr.bf16.mxu0 0
    %111 = vmatpush1.bf16.msra.mxu0 0
    %112 = vmatprep.subr.bf16.mxu0 0
    %113 = vmatpush1.bf16.msra.mxu0 0
    %114 = vmatprep.subr.bf16.mxu0 0
    %115 = vmatpush1.bf16.msra.mxu0 0
    %116 = vmatprep.subr.bf16.mxu0 0
    %117 = vmatpush1.bf16.msra.mxu0 0
    %118 = vmatprep.subr.bf16.mxu0 0
    %119 = vmatpush1.bf16.msra.mxu0 0
    %120 = vmatprep.subr.bf16.mxu0 0
    %121 = vmatpush1.bf16.msra.mxu0 0
    %122 = vmatprep.subr.bf16.mxu0 0
    %123 = vmatpush1.bf16.msra.mxu0 0
    %124 = vmatprep.subr.bf16.mxu0 0
    %125 = vmatpush1.bf16.msra.mxu0 0
    %126 = vmatprep.subr.bf16.mxu0 0
    %127 = vmatpush1.bf16.msra.mxu0 0
    %128 = vmatprep.subr.bf16.mxu0 0
    %129 = vmatpush1.bf16.msra.mxu0 0
    %130 = vmatprep.mubr.bf16.mxu0 0
    %131 = vmatmul.mubr.bf16.gmra.mrb[0].mxu0 %v96
    %v132 = vpop.f32.mrb[0].mxu0
    %v133 = vadd.f32 %v80, %v132
    %v134 = vpop.f32.mrb[0].mxu0
    %v135 = vpop.f32.mrb[0].mxu0
    %v136 = vpop.f32.mrb[0].mxu0
    %137 = vdwg.mxu0
    %v138 = vmax.f32 %v133, 0.0
    %v139 = vpack.c.bf16 %v138, %v138
    %v140 = vld [vmem:[#allocation4] sm:$0xf]
    %v141 = vld [vmem:[#allocation4 + $0x4] sm:$0xf]
    %v142 = vld [vmem:[#allocation4 + $0x8] sm:$0xf]
    %v143 = vld [vmem:[#allocation4 + $0xc] sm:$0xf]
    %v144 = vld [vmem:[#allocation6] sm:$0x1]
    %v146 = vlaneseq
    %v147 = vshrl.u32 %v146, 7
    %v148 = vsub.s32 0, %v147
    %v149 = vrot.slane %v144, %v148
    %v155 = vunpack.c.l.b16 %v140
    %v156 = vunpack.c.l.b16 %v141
    %v157 = vunpack.c.l.b16 %v142
    %v158 = vunpack.c.l.b16 %v143
    %v159 = vpack.c.b16 %v156, %v155
    %v160 = vpack.c.b16 %v158, %v157
    %v164 = vsel %vm94, %v139, 0
    %166 = vmatprep.subr.bf16.mxu0 0
    %167 = vmatpush1.bf16.msra.mxu0 %v159
    %168 = vmatprep.subr.bf16.mxu0 0
    %169 = vmatpush1.bf16.msra.mxu0 %v160
    %170 = vmatprep.subr.bf16.mxu0 0
    %171 = vmatpush1.bf16.msra.mxu0 0
    %172 = vmatprep.subr.bf16.mxu0 0
    %173 = vmatpush1.bf16.msra.mxu0 0
    %174 = vmatprep.subr.bf16.mxu0 0
    %175 = vmatpush1.bf16.msra.mxu0 0
    %176 = vmatprep.subr.bf16.mxu0 0
    %177 = vmatpush1.bf16.msra.mxu0 0
    %178 = vmatprep.subr.bf16.mxu0 0
    %179 = vmatpush1.bf16.msra.mxu0 0
    %180 = vmatprep.subr.bf16.mxu0 0
    %181 = vmatpush1.bf16.msra.mxu0 0
    %182 = vmatprep.subr.bf16.mxu0 0
    %183 = vmatpush1.bf16.msra.mxu0 0
    %184 = vmatprep.subr.bf16.mxu0 0
    %185 = vmatpush1.bf16.msra.mxu0 0
    %186 = vmatprep.subr.bf16.mxu0 0
    %187 = vmatpush1.bf16.msra.mxu0 0
    %188 = vmatprep.subr.bf16.mxu0 0
    %189 = vmatpush1.bf16.msra.mxu0 0
    %190 = vmatprep.subr.bf16.mxu0 0
    %191 = vmatpush1.bf16.msra.mxu0 0
    %192 = vmatprep.subr.bf16.mxu0 0
    %193 = vmatpush1.bf16.msra.mxu0 0
    %194 = vmatprep.subr.bf16.mxu0 0
    %195 = vmatpush1.bf16.msra.mxu0 0
    %196 = vmatprep.subr.bf16.mxu0 0
    %197 = vmatpush1.bf16.msra.mxu0 0
    %198 = vmatprep.mubr.bf16.mxu0 0
    %199 = vmatmul.mubr.bf16.gmra.mrb[0].mxu0 %v164
    %v200 = vpop.f32.mrb[0].mxu0
    %v201 = vadd.f32 %v149, %v200
    %v202 = vpop.f32.mrb[0].mxu0
    %v203 = vpop.f32.mrb[0].mxu0
    %v204 = vpop.f32.mrb[0].mxu0
    %205 = vdwg.mxu0
    %v206 = vmax.f32 %v201, 0.0
    %v207 = vpack.c.bf16 %v206, %v206
    %v208 = vld [vmem:[%s5] sm:$0xf]
    %v209 = vld [vmem:[%s5 + $0x4] sm:$0xf]
    %v210 = vld [vmem:[%s5 + $0x8] sm:$0xf]
    %v211 = vld [vmem:[%s5 + $0xc] sm:$0xf]
    %v212 = vld [vmem:[%s6] sm:$0x1]
    %v214 = vlaneseq
    %v215 = vshrl.u32 %v214, 7
    %v216 = vsub.s32 0, %v215
    %v217 = vrot.slane %v212, %v216
    %v223 = vunpack.c.l.b16 %v208
    %v224 = vunpack.c.l.b16 %v209
    %v225 = vunpack.c.l.b16 %v210
    %v226 = vunpack.c.l.b16 %v211
    %v227 = vpack.c.b16 %v224, %v223
    %v228 = vpack.c.b16 %v226, %v225
    %v232 = vsel %vm94, %v207, 0
    %234 = vmatprep.subr.bf16.mxu0 0
    %235 = vmatpush1.bf16.msra.mxu0 %v227
    %236 = vmatprep.subr.bf16.mxu0 0
    %237 = vmatpush1.bf16.msra.mxu0 %v228
    %238 = vmatprep.subr.bf16.mxu0 0
    %239 = vmatpush1.bf16.msra.mxu0 0
    %240 = vmatprep.subr.bf16.mxu0 0
    %241 = vmatpush1.bf16.msra.mxu0 0
    %242 = vmatprep.subr.bf16.mxu0 0
    %243 = vmatpush1.bf16.msra.mxu0 0
    %244 = vmatprep.subr.bf16.mxu0 0
    %245 = vmatpush1.bf16.msra.mxu0 0
    %246 = vmatprep.subr.bf16.mxu0 0
    %247 = vmatpush1.bf16.msra.mxu0 0
    %248 = vmatprep.subr.bf16.mxu0 0
    %249 = vmatpush1.bf16.msra.mxu0 0
    %250 = vmatprep.subr.bf16.mxu0 0
    %251 = vmatpush1.bf16.msra.mxu0 0
    %252 = vmatprep.subr.bf16.mxu0 0
    %253 = vmatpush1.bf16.msra.mxu0 0
    %254 = vmatprep.subr.bf16.mxu0 0
    %255 = vmatpush1.bf16.msra.mxu0 0
    %256 = vmatprep.subr.bf16.mxu0 0
    %257 = vmatpush1.bf16.msra.mxu0 0
    %258 = vmatprep.subr.bf16.mxu0 0
    %259 = vmatpush1.bf16.msra.mxu0 0
    %260 = vmatprep.subr.bf16.mxu0 0
    %261 = vmatpush1.bf16.msra.mxu0 0
    %262 = vmatprep.subr.bf16.mxu0 0
    %263 = vmatpush1.bf16.msra.mxu0 0
    %264 = vmatprep.subr.bf16.mxu0 0
    %265 = vmatpush1.bf16.msra.mxu0 0
    %266 = vmatprep.mubr.bf16.mxu0 0
    %267 = vmatmul.mubr.bf16.gmra.mrb[0].mxu0 %v232
    %v268 = vpop.f32.mrb[0].mxu0
    %v269 = vadd.f32 %v217, %v268
    %v270 = vpop.f32.mrb[0].mxu0
    %v271 = vpop.f32.mrb[0].mxu0
    %v272 = vpop.f32.mrb[0].mxu0
    %273 = vdwg.mxu0
    %v274 = vmax.f32 %v269, 0.0
    %v275 = vpack.c.bf16 %v274, %v274
    %v276 = vld [vmem:[%s7] sm:$0xf]
    %v277 = vld [vmem:[%s7 + $0x4] sm:$0xf]
    %v278 = vld [vmem:[%s7 + $0x8] sm:$0xf]
    %v279 = vld [vmem:[%s7 + $0xc] sm:$0xf]
    %v280 = vld [vmem:[%s8] sm:$0x1]
    %v282 = vlaneseq
    %v283 = vshrl.u32 %v282, 7
    %v284 = vsub.s32 0, %v283
    %v285 = vrot.slane %v280, %v284
    %v291 = vunpack.c.l.b16 %v276
    %v292 = vunpack.c.l.b16 %v277
    %v293 = vunpack.c.l.b16 %v278
    %v294 = vunpack.c.l.b16 %v279
    %v295 = vpack.c.b16 %v292, %v291
    %v296 = vpack.c.b16 %v294, %v293
    %v300 = vsel %vm94, %v275, 0
    %302 = vmatprep.subr.bf16.mxu0 0
    %303 = vmatpush1.bf16.msra.mxu0 %v295
    %304 = vmatprep.subr.bf16.mxu0 0
    %305 = vmatpush1.bf16.msra.mxu0 %v296
    %306 = vmatprep.subr.bf16.mxu0 0
    %307 = vmatpush1.bf16.msra.mxu0 0
    %308 = vmatprep.subr.bf16.mxu0 0
    %309 = vmatpush1.bf16.msra.mxu0 0
    %310 = vmatprep.subr.bf16.mxu0 0
    %311 = vmatpush1.bf16.msra.mxu0 0
    %312 = vmatprep.subr.bf16.mxu0 0
    %313 = vmatpush1.bf16.msra.mxu0 0
    %314 = vmatprep.subr.bf16.mxu0 0
    %315 = vmatpush1.bf16.msra.mxu0 0
    %316 = vmatprep.subr.bf16.mxu0 0
    %317 = vmatpush1.bf16.msra.mxu0 0
    %318 = vmatprep.subr.bf16.mxu0 0
    %319 = vmatpush1.bf16.msra.mxu0 0
    %320 = vmatprep.subr.bf16.mxu0 0
    %321 = vmatpush1.bf16.msra.mxu0 0
    %322 = vmatprep.subr.bf16.mxu0 0
    %323 = vmatpush1.bf16.msra.mxu0 0
    %324 = vmatprep.subr.bf16.mxu0 0
    %325 = vmatpush1.bf16.msra.mxu0 0
    %326 = vmatprep.subr.bf16.mxu0 0
    %327 = vmatpush1.bf16.msra.mxu0 0
    %328 = vmatprep.subr.bf16.mxu0 0
    %329 = vmatpush1.bf16.msra.mxu0 0
    %330 = vmatprep.subr.bf16.mxu0 0
    %331 = vmatpush1.bf16.msra.mxu0 0
    %332 = vmatprep.subr.bf16.mxu0 0
    %333 = vmatpush1.bf16.msra.mxu0 0
    %334 = vmatprep.mubr.bf16.mxu0 0
    %335 = vmatmul.mubr.bf16.gmra.mrb[0].mxu0 %v300
    %v336 = vpop.f32.mrb[0].mxu0
    %v337 = vadd.f32 %v285, %v336
    %v338 = vpop.f32.mrb[0].mxu0
    %v339 = vpop.f32.mrb[0].mxu0
    %v340 = vpop.f32.mrb[0].mxu0
    %341 = vdwg.mxu0
    %v342 = vmul.f32 %v337, -1.0
    %v343 = vmul.f32 %v342, 1.442695
    %v344 = vpow.pop %v343
    %v345 = vadd.f32 %v344, 1.0
    %v346 = vrcp.pop %v345
    %vm347 = vcmask 31744
    %348 = vst.msk [vmem:[%s9] sm:$0xff] %vm347, %v346
    // Predicated region
    $region50: #{tpu_custom_call.1} parent=1 // pred_check
      _
    $region51: #{tpu_custom_call.1} parent=1 // pred_check_branch
      %350 = sbr.rel (0) target = $region53
    $region52: #{tpu_custom_call.1} parent=1 // pred_region
      _
    $region53: #{tpu_custom_call.1} parent=1 // pred_fallthru
      _
    // Predicated region
    $region54: #{tpu_custom_call.1} parent=1 // pred_check
      _
    $region55: #{tpu_custom_call.1} parent=1 // pred_check_branch
      %352 = sbr.rel (0) target = $region57
    $region56: #{tpu_custom_call.1} parent=1 // pred_region
      _
    $region57: #{tpu_custom_call.1} parent=1 // pred_fallthru
      _
    %353 = vsyncpa [#allocation3], 1
    %354 = vsyncpa [#allocation5], 1

</llo_original>
